<compile_context>
chip_gen: v5e
topology: v5e:2x2
jax: 0.10.0
libtpu: 0.0.40
codegen_flags: <defaults>
</compile_context>

<pallas_src>
import math

import jax
import jax.numpy as jnp
from jax.experimental import pallas as pl
from jax.experimental.pallas import tpu as pltpu


def _round_up(v, m):
    return ((v + m - 1) // m) * m


def _pick_tile(requested, padded, quantum):
    """Largest multiple of `quantum` that is <= min(requested, padded) and divides `padded`."""
    t = min(requested, padded)
    t = max(quantum, (t // quantum) * quantum)
    while padded % t:
        t -= quantum
    return t


# ----------------------------- Stage 1: T = trunc(x @ W) -----------------------------
def _xw_kernel(x_ref, w_ref, o_ref):
    xw = jnp.dot(x_ref[...], w_ref[...], preferred_element_type=jnp.float32)
    # TODO(synk): jnp.trunc only approximates torch .long() -- NaN/Inf and values outside
    # the int64 range behave differently (acceptable for this module's use).
    o_ref[...] = jnp.trunc(xw).astype(o_ref.dtype)


# ------------------- Stage 2: out = G @ T + rowsum(G) * bias -------------------------
def _gxw_kernel(g_ref, t_ref, b_ref, o_ref, rsum_ref):
    k = pl.program_id(2)

    @pl.when(k == 0)
    def _():
        o_ref[...] = jnp.zeros_like(o_ref)
        rsum_ref[...] = jnp.zeros_like(rsum_ref)

    g = g_ref[...]  # bf16, fed straight to the MXU (no f32 upcast)
    # Accumulate directly into the resident f32 output block (no tm x tn scratch).
    o_ref[...] += jnp.dot(g, t_ref[...], preferred_element_type=jnp.float32)
    # Row-sum of G lets us apply the bias in full f32 precision at finalize:
    #   G @ (T + bias) == G @ T + rowsum(G) * bias
    rsum_ref[...] += jnp.sum(g.astype(jnp.float32), axis=1, keepdims=True)

    @pl.when(k == pl.num_programs(2) - 1)
    def _():
        o_ref[...] += rsum_ref[...] * b_ref[...]


def prepare_hgnn_graph(G, n_pad=None):
    """Pad + cast the (static) hypergraph matrix once per graph, outside the hot path.

    TODO(synk): bf16 is exact for 0/1 incidence values (and small integers <= 256); if G
    is a normalized float matrix needing full precision, keep it f32 and accept the
    slower f32 MXU path.
    """
    n = G.shape[0]
    if n_pad is None:
        n_pad = _round_up(n, 128)
    return jnp.pad(G.astype(jnp.bfloat16), ((0, n_pad - n), (0, n_pad - n)))


def hgnn_conv(x, G, weight, bias=None, *, tm=512, tn=1024, tk=512, xw_bf16=True):
    """HGNN_conv forward.

    x:(N,in_ft) f32, G:(N,N) or pre-prepared (N_pad,N_pad) bf16, weight:(in_ft,out_ft),
    bias:(out_ft,) or None.  Set xw_bf16=False if |trunc(x@W)| can exceed 256.
    """
    N, in_ft = x.shape
    out_ft = weight.shape[1]
    f32 = jnp.float32

    # Pad every dimension so blocks satisfy the (8,128) constraint, remainder tiles are
    # zero (no silently dropped rows), and output stores are lane-dense.
    N_pad = _round_up(N, 128)
    K_pad = _round_up(in_ft, 128)
    F_pad = _round_up(out_ft, 128)

    t_dtype = jnp.bfloat16 if xw_bf16 else jnp.float32
    t_bytes = 2 if xw_bf16 else 4

    # ---- tiles (quantum 128 everywhere: MXU-friendly, bf16 sublane packing safe) ----
    tm_ = _pick_tile(tm, N_pad, 128)   # row tile of G / output
    tk_ = _pick_tile(tk, N_pad, 128)   # contraction tile (cols of G / rows of T)
    tn_ = _pick_tile(tn, F_pad, 128)   # output feature tile (covers F when F_pad<=1024)
    # v7x has 2 TensorCores: keep >=2 blocks along a parallel axis when shapes allow.
    if (N_pad // tm_) * (F_pad // tn_) < 2 and N_pad // 128 >= 2:
        tm_ = _pick_tile(max(128, tm_ // 2), N_pad, 128)

    tm1 = _pick_tile(512, N_pad, 128)  # stage-1 row tile
    tf1 = _pick_tile(512, F_pad, 128)  # stage-1 out-feature tile (W is never fully resident)
    # TODO(synk): for extremely large in_ft, also tile K in stage 1 with an accumulator.

    xp = jnp.pad(x.astype(f32), ((0, N_pad - N), (0, K_pad - in_ft)))
    wp = jnp.pad(weight.astype(f32), ((0, K_pad - in_ft), (0, F_pad - out_ft)))
    if bias is None:
        bp = jnp.zeros((1, F_pad), f32)
    else:
        bp = jnp.pad(bias.astype(f32).reshape(1, out_ft), ((0, 0), (0, F_pad - out_ft)))

    # Graph matrix: accept a pre-prepared padded bf16 matrix (preferred: once per graph).
    # TODO(synk): the original module matmuls an int64 (Long) G; the MXU has no int64
    # path, so G is carried as bf16 (exact for 0/1 incidence values).
    if G.dtype == jnp.bfloat16 and G.shape == (N_pad, N_pad):
        gp = G
    else:
        gp = prepare_hgnn_graph(G, N_pad)

    # VMEM budget: actual double-buffered tile footprint + margin, capped at 48 MiB so it
    # always fits v7x's 64 MiB physical VMEM with headroom for compiler scratch.
    def _vmem_limit(nbytes):
        return int(min(max(nbytes + (2 << 20), 16 << 20), 48 << 20))

    vmem1 = _vmem_limit(2 * (tm1 * K_pad * 4 + K_pad * tf1 * 4 + tm1 * tf1 * t_bytes))
    vmem2 = _vmem_limit(2 * (tm_ * tk_ * 2 + tk_ * tn_ * t_bytes + tm_ * tn_ * 4))

    # ---- Stage 1: T = trunc(x @ W) -------------------------------------------------
    xw = pl.pallas_call(
        _xw_kernel,
        out_shape=jax.ShapeDtypeStruct((N_pad, F_pad), t_dtype),
        grid_spec=pltpu.PrefetchScalarGridSpec(
            num_scalar_prefetch=0,
            grid=(N_pad // tm1, F_pad // tf1),
            in_specs=[
                pl.BlockSpec((tm1, K_pad), lambda i, j: (i, 0)),   # x row tile
                pl.BlockSpec((K_pad, tf1), lambda i, j: (0, j)),   # W column tile
            ],
            out_specs=pl.BlockSpec((tm1, tf1), lambda i, j: (i, j)),
        ),
        compiler_params=pltpu.CompilerParams(
            dimension_semantics=("parallel", "parallel"),
            vmem_limit_bytes=vmem1),
    )(xp, wp)

    # ---- Stage 2: out = G @ T + rowsum(G) * bias (K-tiled, resident f32 output) -----
    ce2 = pl.CostEstimate(
        flops=2 * N_pad * N_pad * F_pad,
        transcendentals=0,
        bytes_accessed=(N_pad * N_pad * 2 * (F_pad // tn_)      # G streamed per out-col block
                        + N_pad * F_pad * t_bytes * (N_pad // tm_)  # T re-read per row block
                        + N_pad * F_pad * 4                      # output writeback
                        + F_pad * 4))                            # bias

    out = pl.pallas_call(
        _gxw_kernel,
        out_shape=jax.ShapeDtypeStruct((N_pad, F_pad), f32),
        grid_spec=pltpu.PrefetchScalarGridSpec(
            num_scalar_prefetch=0,
            grid=(N_pad // tm_, F_pad // tn_, N_pad // tk_),
            in_specs=[
                pl.BlockSpec((tm_, tk_), lambda i, j, k: (i, k)),  # G tile (bf16)
                pl.BlockSpec((tk_, tn_), lambda i, j, k: (k, j)),  # T tile
                pl.BlockSpec((1, tn_), lambda i, j, k: (0, j)),    # bias row
            ],
            out_specs=pl.BlockSpec((tm_, tn_), lambda i, j, k: (i, j)),
            scratch_shapes=[pltpu.VMEM((tm_, 1), jnp.float32)],    # rowsum(G) accumulator
        ),
        compiler_params=pltpu.CompilerParams(
            dimension_semantics=("parallel", "parallel", "arbitrary"),
            vmem_limit_bytes=vmem2),
        cost_estimate=ce2,
    )(gp, xw, bp)

    return out[:N, :out_ft]


if __name__ == "__main__":
    key = jax.random.PRNGKey(0)
    N, in_ft, out_ft = 16, 32, 64
    k_w, k_b, k_x, k_g = jax.random.split(key, 4)

    # Deterministic parameter init matching reset_parameters():
    # uniform(-stdv, stdv) with stdv = 1/sqrt(out_ft).
    stdv = 1.0 / math.sqrt(out_ft)
    weight = jax.random.uniform(k_w, (in_ft, out_ft), jnp.float32, -stdv, stdv)
    bias = jax.random.uniform(k_b, (out_ft,), jnp.float32, -stdv, stdv)

    # Example inputs: node features and a LongTensor-like hypergraph incidence matrix.
    x = jax.random.normal(k_x, (N, in_ft), jnp.float32) * 4.0
    G = jax.random.randint(k_g, (N, N), 0, 2, jnp.int32)

    # Prepare the (static) graph matrix once, outside the per-call hot path.
    Gp = prepare_hgnn_graph(G)

    out = hgnn_conv(x, Gp, weight, bias)
    out = jax.block_until_ready(out)

    # Pure-JAX reference of the same semantics (full f32 precision).
    y_ref = jnp.trunc(jnp.matmul(x, weight, precision=jax.lax.Precision.HIGHEST)) + bias
    ref = jnp.matmul(G.astype(jnp.float32), y_ref, precision=jax.lax.Precision.HIGHEST)

    assert out.shape == (N, out_ft)
    assert jnp.allclose(out, ref, atol=1e-3, rtol=1e-3), float(jnp.max(jnp.abs(out - ref)))

    print("KERNEL_OK")
</pallas_src>

<mosaic_0001>
module attributes {stable_mosaic.version = 11 : i64} {
  func.func @_xw_kernel(%arg0: i32, %arg1: i32, %arg2: memref<128x128xf32, #tpu.memory_space<vmem>>, %arg3: memref<128x128xf32, #tpu.memory_space<vmem>>, %arg4: memref<128x128xbf16, #tpu.memory_space<vmem>>) attributes {dimension_semantics = [#tpu.dimension_semantics<parallel>, #tpu.dimension_semantics<parallel>], iteration_bounds = array<i64: 1, 1>, scalar_prefetch = 0 : i64, scratch_operands = 0 : i64, tpu.core_type = #tpu.core_type<tc>, window_params = [{transform_indices = @transform_0, window_bounds = array<i64: 128, 128>}, {transform_indices = @transform_1, window_bounds = array<i64: 128, 128>}, {transform_indices = @transform_2, window_bounds = array<i64: 128, 128>}]} {
    %c0 = arith.constant 0 : index
    %c0_0 = arith.constant 0 : index
    %0 = vector.load %arg2[%c0, %c0_0] : memref<128x128xf32, #tpu.memory_space<vmem>>, vector<128x128xf32>
    %c0_1 = arith.constant 0 : index
    %c0_2 = arith.constant 0 : index
    %1 = vector.load %arg3[%c0_1, %c0_2] : memref<128x128xf32, #tpu.memory_space<vmem>>, vector<128x128xf32>
    %cst = arith.constant dense<0.000000e+00> : vector<128x128xf32>
    %2 = tpu.matmul %0, %1, %cst {dimension_numbers = #tpu.dot_dimension_numbers<[1], [0], [0], [1], [0, 0, 1, 1], [], []>} : vector<128x128xf32>, vector<128x128xf32>, vector<128x128xf32> -> vector<128x128xf32>
    %cst_3 = arith.constant 0.000000e+00 : f32
    %3 = vector.broadcast %cst_3 : f32 to vector<128x128xf32>
    %4 = arith.cmpf olt, %2, %3 : vector<128x128xf32>
    %5 = math.ceil %2 : vector<128x128xf32>
    %6 = math.floor %2 : vector<128x128xf32>
    %7 = arith.select %4, %5, %6 : vector<128x128xi1>, vector<128x128xf32>
    %8 = arith.truncf %7 : vector<128x128xf32> to vector<128x128xbf16>
    %c0_4 = arith.constant 0 : index
    %c0_5 = arith.constant 0 : index
    %9 = vector.load %arg4[%c0_4, %c0_5] : memref<128x128xbf16, #tpu.memory_space<vmem>>, vector<128x128xbf16>
    tpu.vector_store %arg4[%c0_4, %c0_5], %8 {strides = array<i32>} : memref<128x128xbf16, #tpu.memory_space<vmem>>, vector<128x128xbf16>,
    return
  }
  func.func @transform_0(%arg0: i32, %arg1: i32) -> (i32, i32) {
    %c0_i32 = arith.constant 0 : i32
    %c0_i32_0 = arith.constant 0 : i32
    return %arg0, %c0_i32 : i32, i32
  }
  func.func @transform_1(%arg0: i32, %arg1: i32) -> (i32, i32) {
    %c0_i32 = arith.constant 0 : i32
    %c0_i32_0 = arith.constant 0 : i32
    return %c0_i32, %arg1 : i32, i32
  }
  func.func @transform_2(%arg0: i32, %arg1: i32) -> (i32, i32) {
    %c0_i32 = arith.constant 0 : i32
    return %arg0, %arg1 : i32, i32
  }
}

</mosaic_0001>

<llo_original>
// kernel: tpu_custom_call.1
$region0: #{tpu_custom_call.1}
  #allocation0 [shape = 'u32[]', space=smem, size = 0x4, offset = 0x4, fixed_abs, tag = 'smem constant byte address 0x4 - core index']
  #allocation1 [shape = 'u32[72,128]{1,0:T(1,128)}', space=vmem, size = 0x9000, scoped, tag = 'internal scratch']
  %s0 = inlined_call_operand.hbm [shape: f32[128,128], index: 0, kind: input, shape index: {}]
  %s1 = inlined_call_operand.hbm [shape: f32[128,128], index: 1, kind: input, shape index: {}]
  %s2 = inlined_call_operand.hbm [shape: bf16[128,128], index: 2, kind: output, shape index: {}]
  %s3 = sld [smem:[#allocation0]]
  $region26: #{tpu_custom_call.1} parent=0
    _
  %s5 = ssub.s32 1, %s3
  %s6 = scalar_select 0, %s5, %s3
  $region1: #{tpu_custom_call.1} parent=0
    #allocation2 [shape = 'u8[65536]{0}', space=vmem, size = 0x10000, scoped, tag = 'input window, operand 0, single buffered']
    #allocation3 [shape = 's32[1]{0}', space=sflag, size = 0x4, scoped, tag = 'scoped memory for tpu_custom_call.1']
    #allocation4 [shape = 's32[1]{0}', space=sflag, size = 0x4, scoped, tag = 'scoped memory for tpu_custom_call.1']
    #allocation5 [shape = 'u8[65536]{0}', space=vmem, size = 0x10000, scoped, tag = 'input window, operand 1, single buffered']
    #allocation6 [shape = 's32[1]{0}', space=sflag, size = 0x4, scoped, tag = 'scoped memory for tpu_custom_call.1']
    #allocation7 [shape = 'u8[32768]{0}', space=vmem, size = 0x8000, scoped, tag = 'output window, operand 0, single buffered']
    %7 = vsyncpa [#allocation3], 0
    %8 = vsyncpa [#allocation6], 0
    %9 = vsyncpa [#allocation4], 0
    // Predicated region
    $region2: #{tpu_custom_call.1} parent=1 // pred_check
      _
    $region3: #{tpu_custom_call.1} parent=1 // pred_check_branch
      %11 = sbr.rel (0) target = $region5
    $region4: #{tpu_custom_call.1} parent=1 // pred_region
      %13 = vsyncadd [#allocation3], 0
      %s14 = sshll.u32 %s0, 4
      %s15 = int_to_ptr.hbm [resolvable:$true] %s14
      %s16 = sshll.u32 [#allocation2], 4
      %s17 = int_to_ptr.vmem [resolvable:$true] %s16
      %22 = dma.hbm_to_vmem [thread:$0]  %s15, 2048, %s17, [#allocation3], 128, 128, 8
    $region5: #{tpu_custom_call.1} parent=1 // pred_fallthru
      _
    // Predicated region
    $region6: #{tpu_custom_call.1} parent=1 // pred_check
      _
    $region7: #{tpu_custom_call.1} parent=1 // pred_check_branch
      %24 = sbr.rel (0) target = $region9
    $region8: #{tpu_custom_call.1} parent=1 // pred_region
      %26 = vsyncadd [#allocation6], 0
      %s27 = sshll.u32 %s1, 4
      %s28 = int_to_ptr.hbm [resolvable:$true] %s27
      %s29 = sshll.u32 [#allocation5], 4
      %s30 = int_to_ptr.vmem [resolvable:$true] %s29
      %35 = dma.hbm_to_vmem [thread:$0]  %s28, 2048, %s30, [#allocation6], 128, 128, 8
    $region9: #{tpu_custom_call.1} parent=1 // pred_fallthru
      _
    // Predicated region
    $region10: #{tpu_custom_call.1} parent=1 // pred_check
      _
    $region11: #{tpu_custom_call.1} parent=1 // pred_check_branch
      %37 = sbr.rel (0) target = $region13
    $region12: #{tpu_custom_call.1} parent=1 // pred_region
      %39 = dma.done [#allocation3], 2048
    $region13: #{tpu_custom_call.1} parent=1 // pred_fallthru
      _
    // Predicated region
    $region14: #{tpu_custom_call.1} parent=1 // pred_check
      _
    $region15: #{tpu_custom_call.1} parent=1 // pred_check_branch
      %41 = sbr.rel (0) target = $region17
    $region16: #{tpu_custom_call.1} parent=1 // pred_region
      %43 = dma.done [#allocation6], 2048
    $region17: #{tpu_custom_call.1} parent=1 // pred_fallthru
      _
    %v44 = vld [vmem:[#allocation2] sm:$0xff]
    %v45 = vld [vmem:[#allocation2 + $0x8] sm:$0xff]
    %v46 = vld [vmem:[#allocation2 + $0x10] sm:$0xff]
    %v47 = vld [vmem:[#allocation2 + $0x18] sm:$0xff]
    %v48 = vld [vmem:[#allocation2 + $0x20] sm:$0xff]
    %v49 = vld [vmem:[#allocation2 + $0x28] sm:$0xff]
    %v50 = vld [vmem:[#allocation2 + $0x30] sm:$0xff]
    %v51 = vld [vmem:[#allocation2 + $0x38] sm:$0xff]
    %v52 = vld [vmem:[#allocation2 + $0x40] sm:$0xff]
    %v53 = vld [vmem:[#allocation2 + $0x48] sm:$0xff]
    %v54 = vld [vmem:[#allocation2 + $0x50] sm:$0xff]
    %v55 = vld [vmem:[#allocation2 + $0x58] sm:$0xff]
    %v56 = vld [vmem:[#allocation2 + $0x60] sm:$0xff]
    %v57 = vld [vmem:[#allocation2 + $0x68] sm:$0xff]
    %v58 = vld [vmem:[#allocation2 + $0x70] sm:$0xff]
    %v59 = vld [vmem:[#allocation2 + $0x78] sm:$0xff]
    %v60 = vld [vmem:[#allocation5] sm:$0xff]
    %v61 = vld [vmem:[#allocation5 + $0x8] sm:$0xff]
    %v62 = vld [vmem:[#allocation5 + $0x10] sm:$0xff]
    %v63 = vld [vmem:[#allocation5 + $0x18] sm:$0xff]
    %v64 = vld [vmem:[#allocation5 + $0x20] sm:$0xff]
    %v65 = vld [vmem:[#allocation5 + $0x28] sm:$0xff]
    %v66 = vld [vmem:[#allocation5 + $0x30] sm:$0xff]
    %v67 = vld [vmem:[#allocation5 + $0x38] sm:$0xff]
    %v68 = vld [vmem:[#allocation5 + $0x40] sm:$0xff]
    %v69 = vld [vmem:[#allocation5 + $0x48] sm:$0xff]
    %v70 = vld [vmem:[#allocation5 + $0x50] sm:$0xff]
    %v71 = vld [vmem:[#allocation5 + $0x58] sm:$0xff]
    %v72 = vld [vmem:[#allocation5 + $0x60] sm:$0xff]
    %v73 = vld [vmem:[#allocation5 + $0x68] sm:$0xff]
    %v74 = vld [vmem:[#allocation5 + $0x70] sm:$0xff]
    %v75 = vld [vmem:[#allocation5 + $0x78] sm:$0xff]
    %76 = vmatpush.msra.mxu0 %v75
    %77 = vmatpush.msra.mxu0 %v74
    %78 = vmatpush.msra.mxu0 %v73
    %79 = vmatpush.msra.mxu0 %v72
    %80 = vmatpush.msra.mxu0 %v71
    %81 = vmatpush.msra.mxu0 %v70
    %82 = vmatpush.msra.mxu0 %v69
    %83 = vmatpush.msra.mxu0 %v68
    %84 = vmatpush.msra.mxu0 %v67
    %85 = vmatpush.msra.mxu0 %v66
    %86 = vmatpush.msra.mxu0 %v65
    %87 = vmatpush.msra.mxu0 %v64
    %88 = vmatpush.msra.mxu0 %v63
    %89 = vmatpush.msra.mxu0 %v62
    %90 = vmatpush.msra.mxu0 %v61
    %91 = vmatpush.msra.mxu0 %v60
    %92 = vmatmul.f32.gmra.mxu0 %v44
    %v93 = vpop.f32.mrf.mxu0
    %v94 = vadd.f32 0.0, %v93
    %95 = vmatmul.f32.gmra.mxu0 %v45
    %v96 = vpop.f32.mrf.mxu0
    %v97 = vadd.f32 0.0, %v96
    %98 = vmatmul.f32.gmra.mxu0 %v46
    %v99 = vpop.f32.mrf.mxu0
    %v100 = vadd.f32 0.0, %v99
    %101 = vmatmul.f32.gmra.mxu0 %v47
    %v102 = vpop.f32.mrf.mxu0
    %v103 = vadd.f32 0.0, %v102
    %104 = vmatmul.f32.gmra.mxu0 %v48
    %v105 = vpop.f32.mrf.mxu0
    %v106 = vadd.f32 0.0, %v105
    %107 = vmatmul.f32.gmra.mxu0 %v49
    %v108 = vpop.f32.mrf.mxu0
    %v109 = vadd.f32 0.0, %v108
    %110 = vmatmul.f32.gmra.mxu0 %v50
    %v111 = vpop.f32.mrf.mxu0
    %v112 = vadd.f32 0.0, %v111
    %113 = vmatmul.f32.gmra.mxu0 %v51
    %v114 = vpop.f32.mrf.mxu0
    %v115 = vadd.f32 0.0, %v114
    %116 = vmatmul.f32.gmra.mxu0 %v52
    %v117 = vpop.f32.mrf.mxu0
    %v118 = vadd.f32 0.0, %v117
    %119 = vmatmul.f32.gmra.mxu0 %v53
    %v120 = vpop.f32.mrf.mxu0
    %v121 = vadd.f32 0.0, %v120
    %122 = vmatmul.f32.gmra.mxu0 %v54
    %v123 = vpop.f32.mrf.mxu0
    %v124 = vadd.f32 0.0, %v123
    %125 = vmatmul.f32.gmra.mxu0 %v55
    %v126 = vpop.f32.mrf.mxu0
    %v127 = vadd.f32 0.0, %v126
    %128 = vmatmul.f32.gmra.mxu0 %v56
    %v129 = vpop.f32.mrf.mxu0
    %v130 = vadd.f32 0.0, %v129
    %131 = vmatmul.f32.gmra.mxu0 %v57
    %v132 = vpop.f32.mrf.mxu0
    %v133 = vadd.f32 0.0, %v132
    %134 = vmatmul.f32.gmra.mxu0 %v58
    %v135 = vpop.f32.mrf.mxu0
    %v136 = vadd.f32 0.0, %v135
    %137 = vmatmul.f32.gmra.mxu0 %v59
    %v138 = vpop.f32.mrf.mxu0
    %v139 = vadd.f32 0.0, %v138
    %140 = vdwg.mxu0
    %vm141 = vcmp.lt.f32.partialorder %v94, 0.0
    %vm142 = vcmp.lt.f32.partialorder %v97, 0.0
    %vm143 = vcmp.lt.f32.partialorder %v100, 0.0
    %vm144 = vcmp.lt.f32.partialorder %v103, 0.0
    %vm145 = vcmp.lt.f32.partialorder %v106, 0.0
    %vm146 = vcmp.lt.f32.partialorder %v109, 0.0
    %vm147 = vcmp.lt.f32.partialorder %v112, 0.0
    %vm148 = vcmp.lt.f32.partialorder %v115, 0.0
    %vm149 = vcmp.lt.f32.partialorder %v118, 0.0
    %vm150 = vcmp.lt.f32.partialorder %v121, 0.0
    %vm151 = vcmp.lt.f32.partialorder %v124, 0.0
    %vm152 = vcmp.lt.f32.partialorder %v127, 0.0
    %vm153 = vcmp.lt.f32.partialorder %v130, 0.0
    %vm154 = vcmp.lt.f32.partialorder %v133, 0.0
    %vm155 = vcmp.lt.f32.partialorder %v136, 0.0
    %vm156 = vcmp.lt.f32.partialorder %v139, 0.0
    %v157 = vceil.f32 %v94
    %v158 = vceil.f32 %v97
    %v159 = vceil.f32 %v100
    %v160 = vceil.f32 %v103
    %v161 = vceil.f32 %v106
    %v162 = vceil.f32 %v109
    %v163 = vceil.f32 %v112
    %v164 = vceil.f32 %v115
    %v165 = vceil.f32 %v118
    %v166 = vceil.f32 %v121
    %v167 = vceil.f32 %v124
    %v168 = vceil.f32 %v127
    %v169 = vceil.f32 %v130
    %v170 = vceil.f32 %v133
    %v171 = vceil.f32 %v136
    %v172 = vceil.f32 %v139
    %v173 = vfloor.f32 %v94
    %v174 = vfloor.f32 %v97
    %v175 = vfloor.f32 %v100
    %v176 = vfloor.f32 %v103
    %v177 = vfloor.f32 %v106
    %v178 = vfloor.f32 %v109
    %v179 = vfloor.f32 %v112
    %v180 = vfloor.f32 %v115
    %v181 = vfloor.f32 %v118
    %v182 = vfloor.f32 %v121
    %v183 = vfloor.f32 %v124
    %v184 = vfloor.f32 %v127
    %v185 = vfloor.f32 %v130
    %v186 = vfloor.f32 %v133
    %v187 = vfloor.f32 %v136
    %v188 = vfloor.f32 %v139
    %v189 = vsel %vm141, %v157, %v173
    %v190 = vsel %vm142, %v158, %v174
    %v191 = vsel %vm143, %v159, %v175
    %v192 = vsel %vm144, %v160, %v176
    %v193 = vsel %vm145, %v161, %v177
    %v194 = vsel %vm146, %v162, %v178
    %v195 = vsel %vm147, %v163, %v179
    %v196 = vsel %vm148, %v164, %v180
    %v197 = vsel %vm149, %v165, %v181
    %v198 = vsel %vm150, %v166, %v182
    %v199 = vsel %vm151, %v167, %v183
    %v200 = vsel %vm152, %v168, %v184
    %v201 = vsel %vm153, %v169, %v185
    %v202 = vsel %vm154, %v170, %v186
    %v203 = vsel %vm155, %v171, %v187
    %v204 = vsel %vm156, %v172, %v188
    %v205 = vpack.c.bf16 %v189, %v189
    %v206 = vpack.c.bf16 %v190, %v190
    %v207 = vpack.c.bf16 %v191, %v191
    %v208 = vpack.c.bf16 %v192, %v192
    %v209 = vpack.c.bf16 %v193, %v193
    %v210 = vpack.c.bf16 %v194, %v194
    %v211 = vpack.c.bf16 %v195, %v195
    %v212 = vpack.c.bf16 %v196, %v196
    %v213 = vpack.c.bf16 %v197, %v197
    %v214 = vpack.c.bf16 %v198, %v198
    %v215 = vpack.c.bf16 %v199, %v199
    %v216 = vpack.c.bf16 %v200, %v200
    %v217 = vpack.c.bf16 %v201, %v201
    %v218 = vpack.c.bf16 %v202, %v202
    %v219 = vpack.c.bf16 %v203, %v203
    %v220 = vpack.c.bf16 %v204, %v204
    %221 = vst [vmem:[#allocation7] sm:$0xf] %v205
    %222 = vst [vmem:[#allocation7 + $0x4] sm:$0xf] %v206
    %223 = vst [vmem:[#allocation7 + $0x8] sm:$0xf] %v207
    %224 = vst [vmem:[#allocation7 + $0xc] sm:$0xf] %v208
    %225 = vst [vmem:[#allocation7 + $0x10] sm:$0xf] %v209
    %226 = vst [vmem:[#allocation7 + $0x14] sm:$0xf] %v210
    %227 = vst [vmem:[#allocation7 + $0x18] sm:$0xf] %v211
    %228 = vst [vmem:[#allocation7 + $0x1c] sm:$0xf] %v212
    %229 = vst [vmem:[#allocation7 + $0x20] sm:$0xf] %v213
    %230 = vst [vmem:[#allocation7 + $0x24] sm:$0xf] %v214
    %231 = vst [vmem:[#allocation7 + $0x28] sm:$0xf] %v215
    %232 = vst [vmem:[#allocation7 + $0x2c] sm:$0xf] %v216
    %233 = vst [vmem:[#allocation7 + $0x30] sm:$0xf] %v217
    %234 = vst [vmem:[#allocation7 + $0x34] sm:$0xf] %v218
    %235 = vst [vmem:[#allocation7 + $0x38] sm:$0xf] %v219
    %236 = vst [vmem:[#allocation7 + $0x3c] sm:$0xf] %v220
    // Predicated region
    $region18: #{tpu_custom_call.1} parent=1 // pred_check
      _
    $region19: #{tpu_custom_call.1} parent=1 // pred_check_branch
      %238 = sbr.rel (0) target = $region21
    $region20: #{tpu_custom_call.1} parent=1 // pred_region
      %240 = vsyncadd [#allocation4], 0
      %s241 = sshll.u32 [#allocation7], 4
      %s242 = int_to_ptr.vmem [resolvable:$true] %s241
      %s243 = sshll.u32 %s2, 4
      %s244 = int_to_ptr.hbm [resolvable:$true] %s243
      %249 = dma.vmem_to_hbm [thread:$0]  %s242, 1024, %s244, [#allocation4], 64, 64, 4
    $region21: #{tpu_custom_call.1} parent=1 // pred_fallthru
      _
    // Predicated region
    $region22: #{tpu_custom_call.1} parent=1 // pred_check
      _
    $region23: #{tpu_custom_call.1} parent=1 // pred_check_branch
      %251 = sbr.rel (0) target = $region25
    $region24: #{tpu_custom_call.1} parent=1 // pred_region
      %253 = dma.done [#allocation4], 1024
    $region25: #{tpu_custom_call.1} parent=1 // pred_fallthru
      _
    %254 = vsyncpa [#allocation3], 1
    %255 = vsyncpa [#allocation6], 1
    %256 = vsyncpa [#allocation4], 1

</llo_original>
